<compile_context>
chip_gen: v7x
topology: tpu7x:2x2x1
jax: 0.10.0
libtpu: 0.0.40
codegen_flags: <defaults>
</compile_context>

<pallas_src>
import functools

import jax
import jax.numpy as jnp
from jax.experimental import pallas as pl
from jax.experimental.pallas import tpu as pltpu


def _round_up(x, m):
    return (x + m - 1) // m * m


def _embeddings_kernel(patches_ref, w_ref, pos_ref, out_ref):
    # patches_ref: (TM, Kp) bf16   w_ref: (Kp, Ep) bf16
    # pos_ref:     (TM, Ep) f32    (position embedding + conv bias, pre-tiled)
    # out_ref:     (TM, Ep) f32
    proj = jnp.dot(patches_ref[...], w_ref[...],
                   preferred_element_type=jnp.float32)          # MXU, f32 acc
    out_ref[...] = (proj + pos_ref[...]).astype(out_ref.dtype)


def embeddings_forward(x, conv_w, conv_b, class_token, position_embeddings,
                       *, patch_size, block_m=256,
                       compute_dtype=jnp.bfloat16):
    """x: (B, C, H, W) float32 (NCHW, PyTorch convention)."""
    B, C, H, W = x.shape
    P = patch_size
    E = conv_w.shape[0]
    nh, nw = H // P, W // P
    N = nh * nw
    K = C * P * P

    # Padded sizes: lane-dense (multiple of 128) K / E, sublane-aligned N.
    K_pad = _round_up(K, 128)
    E_pad = _round_up(E, 128)
    N_pad = _round_up(N, 8)

    # Pack `reps` whole images per M tile so the positional-embedding tile is
    # grid-invariant; pad B so the grid divides evenly.
    reps = min(max(1, block_m // N_pad), B)
    TM = reps * N_pad
    B_pad = _round_up(B, reps)
    M_pad = B_pad * N_pad
    grid_m = M_pad // TM

    # --- patch extraction (im2col for a stride==kernel conv) ----------------
    # TODO(synk): the NCHW->(B,N,K) gather is expressed with reshape/transpose
    # in the wrapper (fused into the input DMA via allow_input_fusion) rather
    # than an in-kernel strided DMA on the raw NCHW array.
    patches = x.reshape(B, C, nh, P, nw, P)
    patches = patches.transpose(0, 2, 4, 1, 3, 5)        # (B, nh, nw, C, P, P)
    patches = patches.reshape(B, N, K)
    patches = jnp.pad(patches,
                      ((0, B_pad - B), (0, N_pad - N), (0, K_pad - K)))
    patches = patches.reshape(M_pad, K_pad).astype(compute_dtype)

    # Conv weight (E, C, P, P) -> (K, E), padded + bf16.
    w_mat = conv_w.reshape(E, K).T
    w_mat = jnp.pad(w_mat, ((0, K_pad - K), (0, E_pad - E))).astype(compute_dtype)

    # Per-patch additive term: positional embedding (patch rows) + conv bias,
    # tiled to one M tile (constant across the grid), kept in f32.
    pos = position_embeddings.reshape(1 + N, E).astype(jnp.float32)
    pos_patch = pos[1:, :] + conv_b.reshape(1, E).astype(jnp.float32)   # (N, E)
    pos_patch = jnp.pad(pos_patch, ((0, N_pad - N), (0, E_pad - E)))
    pos_tile = jnp.tile(pos_patch, (reps, 1))                           # (TM, Ep)

    out_flat = pl.pallas_call(
        _embeddings_kernel,
        out_shape=jax.ShapeDtypeStruct((M_pad, E_pad), jnp.float32),
        grid=(grid_m,),
        in_specs=[
            pl.BlockSpec((TM, K_pad), lambda m: (m, 0)),
            pl.BlockSpec((K_pad, E_pad), lambda m: (0, 0)),
            pl.BlockSpec((TM, E_pad), lambda m: (0, 0)),
        ],
        out_specs=pl.BlockSpec((TM, E_pad), lambda m: (m, 0)),
        compiler_params=pltpu.CompilerParams(
            dimension_semantics=("parallel",),
            allow_input_fusion=[True, True, True],
        ),
    )(patches, w_mat, pos_tile)

    patch_out = out_flat.reshape(B_pad, N_pad, E_pad)[:B, :N, :E]

    # Class-token row is batch independent: class_token + pos[0]; prepend it
    # outside the kernel (tiny) instead of concatenating inside every tile.
    cls_row = (class_token.reshape(E).astype(jnp.float32) + pos[0]).reshape(1, 1, E)
    cls_rows = jnp.broadcast_to(cls_row, (B, 1, E)).astype(patch_out.dtype)
    return jnp.concatenate([cls_rows, patch_out], axis=1)       # (B, 1+N, E)


def _reference(x, conv_w, conv_b, class_token, position_embeddings, P):
    """Pure-JAX (f32) reference mirroring the PyTorch forward."""
    B = x.shape[0]
    E = conv_w.shape[0]
    y = jax.lax.conv_general_dilated(
        x, conv_w, window_strides=(P, P), padding="VALID",
        dimension_numbers=("NCHW", "OIHW", "NCHW"))             # (B, E, nh, nw)
    y = y + conv_b.reshape(1, E, 1, 1)
    N = y.shape[2] * y.shape[3]
    y = y.reshape(B, E, N).transpose(0, 2, 1)                   # flatten(2).transpose(1,2)
    cls = jnp.broadcast_to(class_token, (B, 1, E))
    y = jnp.concatenate([cls, y], axis=1)
    return y + position_embeddings


if __name__ == "__main__":
    # Small ViT config: image 16x16, patch 4, 4 channels, embed dim 32.
    image_size, patch_size, in_channels, embedding_dim = 16, 4, 4, 32
    num_patches = (image_size // patch_size) ** 2
    B = 2

    key = jax.random.PRNGKey(0)
    kx, kw, kb, kc, kp = jax.random.split(key, 5)

    x = jax.random.normal(kx, (B, in_channels, image_size, image_size),
                          dtype=jnp.float32)
    conv_w = jax.random.normal(
        kw, (embedding_dim, in_channels, patch_size, patch_size),
        dtype=jnp.float32) * 0.05
    conv_b = jax.random.normal(kb, (embedding_dim,), dtype=jnp.float32) * 0.05
    # nn.Parameter(torch.zeros(...)) in __init__; random values here to
    # exercise the cls / positional-embedding paths.
    class_token = jax.random.normal(kc, (1, 1, embedding_dim),
                                    dtype=jnp.float32) * 0.02
    position_embeddings = jax.random.normal(
        kp, (1, 1 + num_patches, embedding_dim), dtype=jnp.float32) * 0.02

    fwd = jax.jit(embeddings_forward, static_argnames=("patch_size",))
    out = fwd(x, conv_w, conv_b, class_token, position_embeddings,
              patch_size=patch_size)
    out = jax.block_until_ready(out)

    ref = _reference(x, conv_w, conv_b, class_token, position_embeddings,
                     patch_size)
    assert out.shape == (B, 1 + num_patches, embedding_dim)
    # bf16 matmul inputs (f32 accumulation) -> slightly looser tolerance.
    assert jnp.allclose(out, ref, atol=2e-2, rtol=2e-2), (
        float(jnp.max(jnp.abs(out - ref))))

    print("KERNEL_OK")
</pallas_src>

<mosaic_0001>
module attributes {stable_mosaic.version = 11 : i64} {
  func.func @_embeddings_kernel(%arg0: i32, %arg1: memref<32x128xbf16, #tpu.memory_space<vmem>>, %arg2: memref<128x128xbf16, #tpu.memory_space<vmem>>, %arg3: memref<32x128xf32, #tpu.memory_space<vmem>>, %arg4: memref<32x128xf32, #tpu.memory_space<vmem>>) attributes {dimension_semantics = [#tpu.dimension_semantics<parallel>], iteration_bounds = array<i64: 1>, scalar_prefetch = 0 : i64, scratch_operands = 0 : i64, tpu.core_type = #tpu.core_type<tc>, window_params = [{transform_indices = @transform_0, window_bounds = array<i64: 32, 128>}, {pipeline_mode = #tpu.pipeline_mode<synchronous>, transform_indices = @transform_1, window_bounds = array<i64: 128, 128>}, {pipeline_mode = #tpu.pipeline_mode<synchronous>, transform_indices = @transform_2, window_bounds = array<i64: 32, 128>}, {transform_indices = @transform_3, window_bounds = array<i64: 32, 128>}]} {
    %c0 = arith.constant 0 : index
    %c0_0 = arith.constant 0 : index
    %0 = vector.load %arg1[%c0, %c0_0] : memref<32x128xbf16, #tpu.memory_space<vmem>>, vector<32x128xbf16>
    %c0_1 = arith.constant 0 : index
    %c0_2 = arith.constant 0 : index
    %1 = vector.load %arg2[%c0_1, %c0_2] : memref<128x128xbf16, #tpu.memory_space<vmem>>, vector<128x128xbf16>
    %cst = arith.constant dense<0.000000e+00> : vector<32x128xf32>
    %2 = tpu.matmul %0, %1, %cst {dimension_numbers = #tpu.dot_dimension_numbers<[1], [0], [0], [1], [0, 0, 1, 1], [], []>} : vector<32x128xbf16>, vector<128x128xbf16>, vector<32x128xf32> -> vector<32x128xf32>
    %c0_3 = arith.constant 0 : index
    %c0_4 = arith.constant 0 : index
    %3 = vector.load %arg3[%c0_3, %c0_4] : memref<32x128xf32, #tpu.memory_space<vmem>>, vector<32x128xf32>
    %4 = arith.addf %2, %3 : vector<32x128xf32>
    %c0_5 = arith.constant 0 : index
    %c0_6 = arith.constant 0 : index
    %5 = vector.load %arg4[%c0_5, %c0_6] : memref<32x128xf32, #tpu.memory_space<vmem>>, vector<32x128xf32>
    tpu.vector_store %arg4[%c0_5, %c0_6], %4 {strides = array<i32>} : memref<32x128xf32, #tpu.memory_space<vmem>>, vector<32x128xf32>,
    return
  }
  func.func @transform_0(%arg0: i32) -> (i32, i32) {
    %c0_i32 = arith.constant 0 : i32
    %c0_i32_0 = arith.constant 0 : i32
    return %arg0, %c0_i32 : i32, i32
  }
  func.func @transform_1(%arg0: i32) -> (i32, i32) {
    %c0_i32 = arith.constant 0 : i32
    %c0_i32_0 = arith.constant 0 : i32
    %c0_i32_1 = arith.constant 0 : i32
    return %c0_i32, %c0_i32_0 : i32, i32
  }
  func.func @transform_2(%arg0: i32) -> (i32, i32) {
    %c0_i32 = arith.constant 0 : i32
    %c0_i32_0 = arith.constant 0 : i32
    %c0_i32_1 = arith.constant 0 : i32
    return %c0_i32, %c0_i32_0 : i32, i32
  }
  func.func @transform_3(%arg0: i32) -> (i32, i32) {
    %c0_i32 = arith.constant 0 : i32
    %c0_i32_0 = arith.constant 0 : i32
    return %arg0, %c0_i32 : i32, i32
  }
}

</mosaic_0001>

<llo_original>
// kernel: embeddings_forward.2
$region0: #{embeddings_forward.2}
  #allocation0 [shape = 'u32[]', space=smem, size = 0x4, offset = 0x4, fixed_abs, tag = 'smem constant byte address 0x4 - core index']
  #allocation1 [shape = 'u32[144,128]{1,0:T(1,128)}', space=vmem, size = 0x12000, scoped, tag = 'internal scratch']
  #allocation2 [shape = 'u32[2048]{0}', space=vmem, size = 0x2000, scoped, tag = 'scoped memory for embeddings_forward.2']
  #allocation3 [shape = 'u32[2048]{0}', space=vmem, size = 0x2000, scoped, tag = 'scoped memory for embeddings_forward.2']
  #allocation4 [shape = 'u32[2048]{0}', space=vmem, size = 0x2000, scoped, tag = 'scoped memory for embeddings_forward.2']
  #allocation5 [shape = 'u32[2048]{0}', space=vmem, size = 0x2000, scoped, tag = 'scoped memory for embeddings_forward.2']
  #allocation6 [shape = 'u32[2048]{0}', space=vmem, size = 0x2000, scoped, tag = 'scoped memory for embeddings_forward.2']
  %s0 = inlined_call_operand.vmem [shape: bf16[32,128], index: 0, kind: input, shape index: {}]
  %s1 = inlined_call_operand.vmem [shape: f32[32,128], index: 1, kind: input, shape index: {}]
  %s2 = inlined_call_operand.vmem [shape: bf16[64,32], index: 2, kind: input, shape index: {}]
  %s3 = inlined_call_operand.<no memory space> [shape: bf16[], index: 3, kind: input, shape index: {}]
  %s4 = inlined_call_operand.vmem [shape: f32[32,128], index: 4, kind: output, shape index: {}]
  %s5 = sld [smem:[#allocation0]]
  $region22: #{embeddings_forward.2} parent=0
    _
  %s7 = ssub.s32 1, %s5
  %s8 = scalar_select 0, %s7, %s5
  %v9 = vstv %s3
  %v10 = vunpack.i.l.bf16 %v9
  %v12 = vunpack.i.h.bf16 %v9
  $region1: #{embeddings_forward.2} parent=0
    #allocation7 [shape = 'u8[32768]{0}', space=vmem, size = 0x8000, dematerialized = true, scoped, tag = 'FusionAdapter Buffer %fusion.1 = bf16[128,128]{1,0:T(8,128)(2,1)} fusion(%param_2.1, %param_3), kind=kLoop, calls=%fused_computation.1.clone, metadata={op_name="jit(embeddings_forward)/jit(_pad)/pad" stack_frame_id=13}']
    // Predicated region
    $region2: #{embeddings_forward.2} parent=1 // pred_check
      _
    $region3: #{embeddings_forward.2} parent=1 // pred_check_branch
      %15 = sbr.rel (0) target = $region5
    $region4: #{embeddings_forward.2} parent=1 // pred_region
      _
    $region5: #{embeddings_forward.2} parent=1 // pred_fallthru
      _
    // Predicated region
    $region6: #{embeddings_forward.2} parent=1 // pred_check
      _
    $region7: #{embeddings_forward.2} parent=1 // pred_check_branch
      %17 = sbr.rel (0) target = $region9
    $region8: #{embeddings_forward.2} parent=1 // pred_region
      _
    $region9: #{embeddings_forward.2} parent=1 // pred_fallthru
      _
    // Predicated region
    $region10: #{embeddings_forward.2} parent=1 // pred_check
      _
    $region11: #{embeddings_forward.2} parent=1 // pred_check_branch
      %19 = sbr.rel (0) target = $region13
    $region12: #{embeddings_forward.2} parent=1 // pred_region
      _
    $region13: #{embeddings_forward.2} parent=1 // pred_fallthru
      _
    %s21 = sor.u32 255, 127
    %s22 = sand.u32 %s21, 85
    %s23 = sshrl.u32 %s22, 1
    %s24 = sor.u32 %s22, %s23
    %s25 = sand.u32 51, %s24
    %s26 = sshrl.u32 %s25, 2
    %s27 = sor.u32 %s25, %s26
    %s28 = sand.u32 15, %s27
    %v29 = vld [vmem:[%s2] sm:%s28]
    %v30 = vunpack.c.l.bf16 %v29
    %v31 = vunpack.c.h.bf16 %v29
    %v32 = vlaneseq
    %v33 = vand.u32 %v32, 127
    %vm35 = vcmp.lt.s32.totalorder %v33, 32
    %v36 = vsel %vm35, %v30, %v10
    %v37 = vpack.c.bf16 0.0, %v36
    %39 = vst [vmem:[#allocation7] sm:$0xf] %v37
    %s40 = scalar_lea.vmem %s2, 4
    %s42 = sor.u32 255, 127
    %s43 = sand.u32 %s42, 85
    %s44 = sshrl.u32 %s43, 1
    %s45 = sor.u32 %s43, %s44
    %s46 = sand.u32 51, %s45
    %s47 = sshrl.u32 %s46, 2
    %s48 = sor.u32 %s46, %s47
    %s49 = sand.u32 15, %s48
    %v50 = vld [vmem:[%s40] sm:%s49]
    %v51 = vunpack.c.l.bf16 %v50
    %v52 = vunpack.c.h.bf16 %v50
    %v53 = vlaneseq
    %v54 = vand.u32 %v53, 127
    %vm56 = vcmp.lt.s32.totalorder %v54, 32
    %v57 = vsel %vm56, %v51, %v10
    %s58 = scalar_lea.vmem [#allocation7], 4
    %v59 = vpack.c.bf16 0.0, %v57
    %61 = vst [vmem:[%s58] sm:$0xf] %v59
    %s62 = scalar_lea.vmem %s2, 8
    %s64 = sor.u32 255, 127
    %s65 = sand.u32 %s64, 85
    %s66 = sshrl.u32 %s65, 1
    %s67 = sor.u32 %s65, %s66
    %s68 = sand.u32 51, %s67
    %s69 = sshrl.u32 %s68, 2
    %s70 = sor.u32 %s68, %s69
    %s71 = sand.u32 15, %s70
    %v72 = vld [vmem:[%s62] sm:%s71]
    %v73 = vunpack.c.l.bf16 %v72
    %v74 = vunpack.c.h.bf16 %v72
    %v75 = vlaneseq
    %v76 = vand.u32 %v75, 127
    %vm78 = vcmp.lt.s32.totalorder %v76, 32
    %v79 = vsel %vm78, %v73, %v10
    %s80 = scalar_lea.vmem [#allocation7], 8
    %v81 = vpack.c.bf16 0.0, %v79
    %83 = vst [vmem:[%s80] sm:$0xf] %v81
    %s84 = scalar_lea.vmem %s2, 12
    %s86 = sor.u32 255, 127
    %s87 = sand.u32 %s86, 85
    %s88 = sshrl.u32 %s87, 1
    %s89 = sor.u32 %s87, %s88
    %s90 = sand.u32 51, %s89
    %s91 = sshrl.u32 %s90, 2
    %s92 = sor.u32 %s90, %s91
    %s93 = sand.u32 15, %s92
    %v94 = vld [vmem:[%s84] sm:%s93]
    %v95 = vunpack.c.l.bf16 %v94
    %v96 = vunpack.c.h.bf16 %v94
    %v97 = vlaneseq
    %v98 = vand.u32 %v97, 127
    %vm100 = vcmp.lt.s32.totalorder %v98, 32
    %v101 = vsel %vm100, %v95, %v10
    %s102 = scalar_lea.vmem [#allocation7], 12
    %v103 = vpack.c.bf16 0.0, %v101
    %105 = vst [vmem:[%s102] sm:$0xf] %v103
    %s106 = scalar_lea.vmem %s2, 16
    %s108 = sor.u32 255, 127
    %s109 = sand.u32 %s108, 85
    %s110 = sshrl.u32 %s109, 1
    %s111 = sor.u32 %s109, %s110
    %s112 = sand.u32 51, %s111
    %s113 = sshrl.u32 %s112, 2
    %s114 = sor.u32 %s112, %s113
    %s115 = sand.u32 15, %s114
    %v116 = vld [vmem:[%s106] sm:%s115]
    %v117 = vunpack.c.l.bf16 %v116
    %v118 = vunpack.c.h.bf16 %v116
    %v119 = vlaneseq
    %v120 = vand.u32 %v119, 127
    %vm122 = vcmp.lt.s32.totalorder %v120, 32
    %v123 = vsel %vm122, %v117, %v10
    %s124 = scalar_lea.vmem [#allocation7], 16
    %v125 = vpack.c.bf16 0.0, %v123
    %127 = vst [vmem:[%s124] sm:$0xf] %v125
    %s128 = scalar_lea.vmem %s2, 20
    %s130 = sor.u32 255, 127
    %s131 = sand.u32 %s130, 85
    %s132 = sshrl.u32 %s131, 1
    %s133 = sor.u32 %s131, %s132
    %s134 = sand.u32 51, %s133
    %s135 = sshrl.u32 %s134, 2
    %s136 = sor.u32 %s134, %s135
    %s137 = sand.u32 15, %s136
    %v138 = vld [vmem:[%s128] sm:%s137]
    %v139 = vunpack.c.l.bf16 %v138
    %v140 = vunpack.c.h.bf16 %v138
    %v141 = vlaneseq
    %v142 = vand.u32 %v141, 127
    %vm144 = vcmp.lt.s32.totalorder %v142, 32
    %v145 = vsel %vm144, %v139, %v10
    %s146 = scalar_lea.vmem [#allocation7], 20
    %v147 = vpack.c.bf16 0.0, %v145
    %149 = vst [vmem:[%s146] sm:$0xf] %v147
    %s150 = scalar_lea.vmem %s2, 24
    %s152 = sor.u32 255, 127
    %s153 = sand.u32 %s152, 85
    %s154 = sshrl.u32 %s153, 1
    %s155 = sor.u32 %s153, %s154
    %s156 = sand.u32 51, %s155
    %s157 = sshrl.u32 %s156, 2
    %s158 = sor.u32 %s156, %s157
    %s159 = sand.u32 15, %s158
    %v160 = vld [vmem:[%s150] sm:%s159]
    %v161 = vunpack.c.l.bf16 %v160
    %v162 = vunpack.c.h.bf16 %v160
    %v163 = vlaneseq
    %v164 = vand.u32 %v163, 127
    %vm166 = vcmp.lt.s32.totalorder %v164, 32
    %v167 = vsel %vm166, %v161, %v10
    %s168 = scalar_lea.vmem [#allocation7], 24
    %v169 = vpack.c.bf16 0.0, %v167
    %171 = vst [vmem:[%s168] sm:$0xf] %v169
    %s172 = scalar_lea.vmem %s2, 28
    %s174 = sor.u32 255, 127
    %s175 = sand.u32 %s174, 85
    %s176 = sshrl.u32 %s175, 1
    %s177 = sor.u32 %s175, %s176
    %s178 = sand.u32 51, %s177
    %s179 = sshrl.u32 %s178, 2
    %s180 = sor.u32 %s178, %s179
    %s181 = sand.u32 15, %s180
    %v182 = vld [vmem:[%s172] sm:%s181]
    %v183 = vunpack.c.l.bf16 %v182
    %v184 = vunpack.c.h.bf16 %v182
    %v185 = vlaneseq
    %v186 = vand.u32 %v185, 127
    %vm188 = vcmp.lt.s32.totalorder %v186, 32
    %v189 = vsel %vm188, %v183, %v10
    %s190 = scalar_lea.vmem [#allocation7], 28
    %v191 = vpack.c.bf16 0.0, %v189
    %193 = vst [vmem:[%s190] sm:$0xf] %v191
    %s194 = scalar_lea.vmem [#allocation7], 32
    %v195 = vpack.c.bf16 0.0, %v10
    %197 = vst [vmem:[%s194] sm:$0xf] %v195
    %s198 = scalar_lea.vmem [#allocation7], 36
    %v199 = vpack.c.bf16 0.0, %v10
    %201 = vst [vmem:[%s198] sm:$0xf] %v199
    %s202 = scalar_lea.vmem [#allocation7], 40
    %v203 = vpack.c.bf16 0.0, %v10
    %205 = vst [vmem:[%s202] sm:$0xf] %v203
    %s206 = scalar_lea.vmem [#allocation7], 44
    %v207 = vpack.c.bf16 0.0, %v10
    %209 = vst [vmem:[%s206] sm:$0xf] %v207
    %s210 = scalar_lea.vmem [#allocation7], 48
    %v211 = vpack.c.bf16 0.0, %v10
    %213 = vst [vmem:[%s210] sm:$0xf] %v211
    %s214 = scalar_lea.vmem [#allocation7], 52
    %v215 = vpack.c.bf16 0.0, %v10
    %217 = vst [vmem:[%s214] sm:$0xf] %v215
    %s218 = scalar_lea.vmem [#allocation7], 56
    %v219 = vpack.c.bf16 0.0, %v10
    %221 = vst [vmem:[%s218] sm:$0xf] %v219
    %s222 = scalar_lea.vmem [#allocation7], 60
    %v223 = vpack.c.bf16 0.0, %v10
    %225 = vst [vmem:[%s222] sm:$0xf] %v223
    %v227 = vld [vmem:[%s0] sm:$0xf]
    %v228 = vld [vmem:[%s0 + $0x4] sm:$0xf]
    %v229 = vld [vmem:[%s0 + $0x8] sm:$0xf]
    %v230 = vld [vmem:[%s0 + $0xc] sm:$0xf]
    %v231 = vld [vmem:[#allocation7] sm:$0xf]
    %v232 = vld [vmem:[#allocation7 + $0x4] sm:$0xf]
    %v233 = vld [vmem:[#allocation7 + $0x8] sm:$0xf]
    %v234 = vld [vmem:[#allocation7 + $0xc] sm:$0xf]
    %v235 = vld [vmem:[#allocation7 + $0x10] sm:$0xf]
    %v236 = vld [vmem:[#allocation7 + $0x14] sm:$0xf]
    %v237 = vld [vmem:[#allocation7 + $0x18] sm:$0xf]
    %v238 = vld [vmem:[#allocation7 + $0x1c] sm:$0xf]
    %v239 = vld [vmem:[#allocation7 + $0x20] sm:$0xf]
    %v240 = vld [vmem:[#allocation7 + $0x24] sm:$0xf]
    %v241 = vld [vmem:[#allocation7 + $0x28] sm:$0xf]
    %v242 = vld [vmem:[#allocation7 + $0x2c] sm:$0xf]
    %v243 = vld [vmem:[#allocation7 + $0x30] sm:$0xf]
    %v244 = vld [vmem:[#allocation7 + $0x34] sm:$0xf]
    %v245 = vld [vmem:[#allocation7 + $0x38] sm:$0xf]
    %v246 = vld [vmem:[#allocation7 + $0x3c] sm:$0xf]
    %v247 = vld [vmem:[%s1] sm:$0xff]
    %v248 = vld [vmem:[%s1 + $0x8] sm:$0xff]
    %v249 = vld [vmem:[%s1 + $0x10] sm:$0xff]
    %v250 = vld [vmem:[%s1 + $0x18] sm:$0xff]
    %v255 = vunpack.c.l.b16 %v227
    %v256 = vunpack.c.l.b16 %v228
    %v257 = vunpack.c.l.b16 %v229
    %v258 = vunpack.c.l.b16 %v230
    %v259 = vpack.c.b16 %v256, %v255
    %v260 = vpack.c.b16 %v258, %v257
    %v279 = vunpack.c.l.b16 %v231
    %v280 = vunpack.c.l.b16 %v232
    %v281 = vunpack.c.l.b16 %v233
    %v282 = vunpack.c.l.b16 %v234
    %v283 = vunpack.c.l.b16 %v235
    %v284 = vunpack.c.l.b16 %v236
    %v285 = vunpack.c.l.b16 %v237
    %v286 = vunpack.c.l.b16 %v238
    %v287 = vunpack.c.l.b16 %v239
    %v288 = vunpack.c.l.b16 %v240
    %v289 = vunpack.c.l.b16 %v241
    %v290 = vunpack.c.l.b16 %v242
    %v291 = vunpack.c.l.b16 %v243
    %v292 = vunpack.c.l.b16 %v244
    %v293 = vunpack.c.l.b16 %v245
    %v294 = vunpack.c.l.b16 %v246
    %v295 = vpack.c.b16 %v280, %v279
    %v296 = vpack.c.b16 %v282, %v281
    %v297 = vpack.c.b16 %v284, %v283
    %v298 = vpack.c.b16 %v286, %v285
    %v299 = vpack.c.b16 %v288, %v287
    %v300 = vpack.c.b16 %v290, %v289
    %v301 = vpack.c.b16 %v292, %v291
    %v302 = vpack.c.b16 %v294, %v293
    %311 = vmatprep.subr.bf16.mxu0 0
    %312 = vmatpush1.bf16.msra.mxu0 %v295
    %313 = vmatprep.subr.bf16.mxu0 0
    %314 = vmatpush1.bf16.msra.mxu0 %v296
    %315 = vmatprep.subr.bf16.mxu0 0
    %316 = vmatpush1.bf16.msra.mxu0 %v297
    %317 = vmatprep.subr.bf16.mxu0 0
    %318 = vmatpush1.bf16.msra.mxu0 %v298
    %319 = vmatprep.subr.bf16.mxu0 0
    %320 = vmatpush1.bf16.msra.mxu0 %v299
    %321 = vmatprep.subr.bf16.mxu0 0
    %322 = vmatpush1.bf16.msra.mxu0 %v300
    %323 = vmatprep.subr.bf16.mxu0 0
    %324 = vmatpush1.bf16.msra.mxu0 %v301
    %325 = vmatprep.subr.bf16.mxu0 0
    %326 = vmatpush1.bf16.msra.mxu0 %v302
    %327 = vmatprep.subr.bf16.mxu0 0
    %328 = vmatpush1.bf16.msra.mxu0 0
    %329 = vmatprep.subr.bf16.mxu0 0
    %330 = vmatpush1.bf16.msra.mxu0 0
    %331 = vmatprep.subr.bf16.mxu0 0
    %332 = vmatpush1.bf16.msra.mxu0 0
    %333 = vmatprep.subr.bf16.mxu0 0
    %334 = vmatpush1.bf16.msra.mxu0 0
    %335 = vmatprep.subr.bf16.mxu0 0
    %336 = vmatpush1.bf16.msra.mxu0 0
    %337 = vmatprep.subr.bf16.mxu0 0
    %338 = vmatpush1.bf16.msra.mxu0 0
    %339 = vmatprep.subr.bf16.mxu0 0
    %340 = vmatpush1.bf16.msra.mxu0 0
    %341 = vmatprep.subr.bf16.mxu0 0
    %342 = vmatpush1.bf16.msra.mxu0 0
    %343 = vmatprep.mubr.bf16.mxu0 0
    %344 = vmatmul.mubr.bf16.gmra.mrb[0].mxu0 %v259
    %v345 = vpop.f32.mrb[0].mxu0
    %v346 = vadd.f32 %v247, %v345
    %v347 = vpop.f32.mrb[0].mxu0
    %v348 = vpop.f32.mrb[0].mxu0
    %v349 = vadd.f32 %v248, %v348
    %v350 = vpop.f32.mrb[0].mxu0
    %351 = vmatprep.mubr.bf16.mxu0 0
    %352 = vmatmul.mubr.bf16.gmra.mrb[0].mxu0 %v260
    %v353 = vpop.f32.mrb[0].mxu0
    %v354 = vadd.f32 %v249, %v353
    %v355 = vpop.f32.mrb[0].mxu0
    %v356 = vpop.f32.mrb[0].mxu0
    %v357 = vadd.f32 %v250, %v356
    %v358 = vpop.f32.mrb[0].mxu0
    %359 = vdwg.mxu0
    %360 = vst [vmem:[%s4] sm:$0xff] %v346
    %361 = vst [vmem:[%s4 + $0x8] sm:$0xff] %v349
    %362 = vst [vmem:[%s4 + $0x10] sm:$0xff] %v354
    %363 = vst [vmem:[%s4 + $0x18] sm:$0xff] %v357
    // Predicated region
    $region14: #{embeddings_forward.2} parent=1 // pred_check
      _
    $region15: #{embeddings_forward.2} parent=1 // pred_check_branch
      %365 = sbr.rel (0) target = $region17
    $region16: #{embeddings_forward.2} parent=1 // pred_region
      _
    $region17: #{embeddings_forward.2} parent=1 // pred_fallthru
      _
    // Predicated region
    $region18: #{embeddings_forward.2} parent=1 // pred_check
      _
    $region19: #{embeddings_forward.2} parent=1 // pred_check_branch
      %367 = sbr.rel (0) target = $region21
    $region20: #{embeddings_forward.2} parent=1 // pred_region
      _
    $region21: #{embeddings_forward.2} parent=1 // pred_fallthru
      _

</llo_original>
